<compile_context>
chip_gen: v7x
topology: tpu7x:2x2x1
jax: 0.10.0
libtpu: 0.0.40
codegen_flags: <defaults>
</compile_context>

<pallas_src>
import jax
import jax.numpy as jnp
from jax.experimental import pallas as pl
from jax.experimental.pallas import tpu as pltpu

_INV_SQRT2 = 0.7071067811865476
_HEAD = 256


def _gelu_exact(x):
    # nn.GELU() default in PyTorch is the exact (erf-based) GELU.
    return 0.5 * x * (1.0 + jax.lax.erf(x * _INV_SQRT2))


def _round_up(n, m):
    return ((n + m - 1) // m) * m


def attr_pred_head_kernel(
    x_ref,            # (TB, dim)      bf16 (or f32)
    w1_ref, b1_ref,   # (dim, hid) bf16, (1, hid)  f32
    w2_ref, b2_ref,   # (hid, dim) bf16, (1, dim)  f32
    w3_ref, b3_ref,   # (dim, 256) bf16, (1, 256)  f32
    w4_ref,           # (1, 256)   f32  (row vector of the last Linear)
    b4_ref,           # (1, 1)     f32, SMEM scalar
    out_ref,          # (1, 1, TB) f32  (lane-dense per-tile row)
):
    x = x_ref[...]
    x_lp = x.astype(jnp.bfloat16)
    x_f32 = x.astype(jnp.float32)         # residual add in f32 (of bf16-rounded x)

    # --- adapter: Linear -> GELU -> Linear, residual add in f32 ---
    h = jnp.dot(x_lp, w1_ref[...], preferred_element_type=jnp.float32) + b1_ref[...]
    h = _gelu_exact(h)
    a = jnp.dot(h.astype(jnp.bfloat16), w2_ref[...],
                preferred_element_type=jnp.float32) + b2_ref[...]
    f = x_f32 + a

    # --- heads: Linear -> ReLU ---
    h2 = jnp.dot(f.astype(jnp.bfloat16), w3_ref[...],
                 preferred_element_type=jnp.float32) + b3_ref[...]
    h2 = jnp.maximum(h2, 0.0)

    # --- final Linear(256, 1): N=1 wastes the MXU; use a VPU multiply + row
    #     reduction and store a lane-dense (1, 1, TB) row. ---
    y = jnp.sum(h2 * w4_ref[...], axis=-1) + b4_ref[0, 0]   # (TB,)
    out_ref[...] = y.reshape(1, 1, -1).astype(out_ref.dtype)


def _vmem_footprint_bytes(tb, dim, hid, head, x_bytes):
    """Rough per-TC VMEM footprint of one grid step (used for budgeting)."""
    x_buf = 2 * tb * dim * x_bytes                        # double-buffered x tile
    out_buf = 2 * tb * 4                                   # double-buffered out row
    w_bytes = (dim * hid + hid * dim + dim * head) * 2     # bf16, single-buffered
    b_bytes = (hid + dim + head + head) * 4                # f32 biases + w4
    inter = tb * (hid + 2 * dim + head) * 4                # f32 intermediates
    inter += tb * (2 * dim + hid) * 2                      # bf16 operand casts
    return x_buf + out_buf + w_bytes + b_bytes + inter


def attr_pred_head_forward(feature, params, *, tb=1024, x_dtype=jnp.bfloat16):
    """feature: (B, dim). params: dict of pre-transposed weights / biases."""
    B, dim = feature.shape
    hid = params["w1"].shape[1]
    head_w = params["w3"].shape[1]
    x_bytes = jnp.dtype(x_dtype).itemsize
    sub = 16 if x_bytes == 2 else 8        # sublane granularity for the x tile

    feature = feature.astype(x_dtype)

    # Only pad sub-sublane batches (tiny copy).  Larger batches are NOT padded:
    # the ragged last block is handled by Pallas; its undefined rows never mix
    # with valid rows (everything here is per-row) and are sliced off below.
    if B < sub:
        feature = jnp.pad(feature, ((0, sub - B), (0, 0)))
    b_eff = max(B, sub)

    # Batch tile: multiple of `sub`, never taller than the (rounded-down) batch.
    tb = max(sub, _round_up(min(tb, b_eff), sub))
    tb = min(tb, max(sub, (b_eff // sub) * sub))
    # Ensure >= 2 grid steps when the batch allows it so both v7x TensorCores
    # get work on the "parallel" axis (one extra ~0.35us step on v5e/v6e).
    if b_eff >= 2 * sub:
        tb = min(tb, _round_up(pl.cdiv(b_eff, 2), sub))

    # VMEM budget: never request the full physical VMEM (64 MiB/TC on v7x).
    try:
        phys_vmem = int(getattr(pltpu.get_tpu_info(), "vmem_capacity_bytes",
                                64 * 1024 * 1024))
    except Exception:
        phys_vmem = 64 * 1024 * 1024       # conservative default (v7x per-TC)
    budget = phys_vmem // 2
    while tb > sub and _vmem_footprint_bytes(tb, dim, hid, head_w, x_bytes) > budget:
        tb = max(sub, _round_up(tb // 2, sub))
    footprint = _vmem_footprint_bytes(tb, dim, hid, head_w, x_bytes)
    vmem_limit = int(min(max(2 * footprint + (4 << 20), 32 << 20),
                         int(phys_vmem * 0.8)))

    num_tiles = pl.cdiv(b_eff, tb)

    # bf16 weights for the MXU (halves weight DMA); biases, the final row
    # vector w4 and the scalar b4 stay f32 (added after f32 accumulation).
    w1 = params["w1"].astype(jnp.bfloat16)
    w2 = params["w2"].astype(jnp.bfloat16)
    w3 = params["w3"].astype(jnp.bfloat16)
    b1 = params["b1"].reshape(1, hid).astype(jnp.float32)
    b2 = params["b2"].reshape(1, dim).astype(jnp.float32)
    b3 = params["b3"].reshape(1, head_w).astype(jnp.float32)
    w4 = params["w4"].reshape(1, head_w).astype(jnp.float32)
    b4 = params["b4"].reshape(1, 1).astype(jnp.float32)

    def _run(single_buffer_weights):
        def const(shape):
            idx = lambda i, n=len(shape): (0,) * n
            if single_buffer_weights:
                # Constant index_map -> DMA'd once; single buffer halves VMEM.
                return pl.BlockSpec(shape, idx, pipeline_mode=pl.Buffered(1))
            return pl.BlockSpec(shape, idx)

        return pl.pallas_call(
            attr_pred_head_kernel,
            out_shape=jax.ShapeDtypeStruct((num_tiles, 1, tb), jnp.float32),
            grid=(num_tiles,),
            in_specs=[
                pl.BlockSpec((tb, dim), lambda i: (i, 0)),       # x: batch-tiled
                const(w1.shape), const(b1.shape),
                const(w2.shape), const(b2.shape),
                const(w3.shape), const(b3.shape),
                const(w4.shape),
                pl.BlockSpec(memory_space=pltpu.MemorySpace.SMEM),  # b4 scalar
            ],
            out_specs=pl.BlockSpec((1, 1, tb), lambda i: (i, 0, 0)),
            compiler_params=pltpu.CompilerParams(
                dimension_semantics=("parallel",),
                vmem_limit_bytes=vmem_limit,
            ),
        )(feature, w1, b1, w2, b2, w3, b3, w4, b4)

    try:
        out = _run(True)
    except Exception:
        # Older jax without pipeline_mode / Buffered(1): default double buffering.
        out = _run(False)

    # (num_tiles, 1, tb) is contiguous in batch order -> flatten, drop padding /
    # ragged-tail garbage rows.
    return out.reshape(-1)[:B].reshape(B, 1)


def init_params(key, dim):
    """Mirror _init_weights: trunc_normal_(std=0.02) weights, zero biases.
    Weights are returned already transposed to (in_features, out_features)."""
    def trunc_normal(k, shape, std=0.02):
        return std * jax.random.truncated_normal(k, -2.0, 2.0, shape, jnp.float32)

    k1, k2, k3, k4 = jax.random.split(key, 4)
    hid = dim // 4
    return {
        "w1": trunc_normal(k1, (dim, hid)),
        "b1": jnp.zeros((1, hid), jnp.float32),
        "w2": trunc_normal(k2, (hid, dim)),
        "b2": jnp.zeros((1, dim), jnp.float32),
        "w3": trunc_normal(k3, (dim, 256)),
        "b3": jnp.zeros((1, 256), jnp.float32),
        "w4": trunc_normal(k4, (256, 1)),
        "b4": jnp.zeros((1, 1), jnp.float32),
    }


def reference_forward_f32(feature, params):
    """Pure f32 JAX reference matching the PyTorch module exactly."""
    x = feature.astype(jnp.float32)
    h = x @ params["w1"] + params["b1"]
    h = _gelu_exact(h)
    a = h @ params["w2"] + params["b2"]
    f = x + a
    h2 = jnp.maximum(f @ params["w3"] + params["b3"], 0.0)
    return h2 @ params["w4"] + params["b4"]


def reference_forward_mixed(feature, params, x_dtype=jnp.bfloat16):
    """Reference mimicking the kernel's bf16 input / bf16 operand / f32 accumulate."""
    bf = jnp.bfloat16
    x_in = feature.astype(x_dtype)
    x_lp = x_in.astype(bf)
    x32 = x_in.astype(jnp.float32)
    h = jnp.dot(x_lp, params["w1"].astype(bf),
                preferred_element_type=jnp.float32) + params["b1"]
    h = _gelu_exact(h)
    a = jnp.dot(h.astype(bf), params["w2"].astype(bf),
                preferred_element_type=jnp.float32) + params["b2"]
    f = x32 + a
    h2 = jnp.dot(f.astype(bf), params["w3"].astype(bf),
                 preferred_element_type=jnp.float32) + params["b3"]
    h2 = jnp.maximum(h2, 0.0)
    w4 = params["w4"].reshape(1, -1)
    return jnp.sum(h2 * w4, axis=-1, keepdims=True) + params["b4"].reshape(1, 1)


if __name__ == "__main__":
    key = jax.random.PRNGKey(0)

    # Config 1: module's toy shape (B=2, dim=32)  -> single padded tile.
    # Config 2: B=20, dim=64, small tb hint       -> ragged last block, no pad.
    # Config 3: B=40, dim=128, default tb         -> megacore cap -> 2 tiles.
    for (B, dim, tb) in [(2, 32, 1024), (20, 64, 8), (40, 128, 1024)]:
        key, k_feat, k_par = jax.random.split(key, 3)
        feature = jax.random.normal(k_feat, (B, dim), jnp.float32)
        params = init_params(k_par, dim)

        y = attr_pred_head_forward(feature, params, tb=tb)
        y = jax.block_until_ready(y)
        assert y.shape == (B, 1), y.shape
        assert bool(jnp.all(jnp.isfinite(y)))

        y_mixed = reference_forward_mixed(feature, params)
        y_f32 = reference_forward_f32(feature, params)
        # Tight check vs a reference using the same bf16/f32 mixed precision.
        assert jnp.allclose(y, y_mixed, atol=5e-4, rtol=5e-4), (y, y_mixed)
        # Sanity check vs the exact-f32 PyTorch semantics (bf16 MXU tolerance).
        assert jnp.allclose(y, y_f32, atol=5e-3, rtol=5e-2), (y, y_f32)

    print("KERNEL_OK")
</pallas_src>

<mosaic_0001>
module attributes {stable_mosaic.version = 11 : i64} {
  func.func @attr_pred_head_kernel(%arg0: i32, %arg1: memref<16x32xbf16, #tpu.memory_space<vmem>>, %arg2: memref<32x8xbf16, #tpu.memory_space<vmem>>, %arg3: memref<1x8xf32, #tpu.memory_space<vmem>>, %arg4: memref<8x32xbf16, #tpu.memory_space<vmem>>, %arg5: memref<1x32xf32, #tpu.memory_space<vmem>>, %arg6: memref<32x256xbf16, #tpu.memory_space<vmem>>, %arg7: memref<1x256xf32, #tpu.memory_space<vmem>>, %arg8: memref<1x256xf32, #tpu.memory_space<vmem>>, %arg9: memref<1x1xf32, #tpu.memory_space<smem>>, %arg10: memref<1x1x16xf32, #tpu.memory_space<vmem>>) attributes {dimension_semantics = [#tpu.dimension_semantics<parallel>], iteration_bounds = array<i64: 1>, scalar_prefetch = 0 : i64, scratch_operands = 0 : i64, tpu.core_type = #tpu.core_type<tc>, window_params = [{transform_indices = @transform_0, window_bounds = array<i64: 16, 32>}, {pipeline_mode = #tpu.pipeline_mode<synchronous>, transform_indices = @transform_1, window_bounds = array<i64: 32, 8>}, {pipeline_mode = #tpu.pipeline_mode<synchronous>, transform_indices = @transform_2, window_bounds = array<i64: 1, 8>}, {pipeline_mode = #tpu.pipeline_mode<synchronous>, transform_indices = @transform_3, window_bounds = array<i64: 8, 32>}, {pipeline_mode = #tpu.pipeline_mode<synchronous>, transform_indices = @transform_4, window_bounds = array<i64: 1, 32>}, {pipeline_mode = #tpu.pipeline_mode<synchronous>, transform_indices = @transform_5, window_bounds = array<i64: 32, 256>}, {pipeline_mode = #tpu.pipeline_mode<synchronous>, transform_indices = @transform_6, window_bounds = array<i64: 1, 256>}, {pipeline_mode = #tpu.pipeline_mode<synchronous>, transform_indices = @transform_7, window_bounds = array<i64: 1, 256>}, {transform_indices = @transform_8, window_bounds = array<i64: 1, 1>}, {transform_indices = @transform_9, window_bounds = array<i64: 1, 1, 16>}]} {
    %c0 = arith.constant 0 : index
    %c0_0 = arith.constant 0 : index
    %0 = vector.load %arg1[%c0, %c0_0] : memref<16x32xbf16, #tpu.memory_space<vmem>>, vector<16x32xbf16>
    %1 = arith.extf %0 : vector<16x32xbf16> to vector<16x32xf32>
    %c0_1 = arith.constant 0 : index
    %c0_2 = arith.constant 0 : index
    %2 = vector.load %arg2[%c0_1, %c0_2] : memref<32x8xbf16, #tpu.memory_space<vmem>>, vector<32x8xbf16>
    %cst = arith.constant dense<0.000000e+00> : vector<16x8xf32>
    %3 = tpu.matmul %0, %2, %cst {dimension_numbers = #tpu.dot_dimension_numbers<[1], [0], [0], [1], [0, 0, 1, 1], [], []>} : vector<16x32xbf16>, vector<32x8xbf16>, vector<16x8xf32> -> vector<16x8xf32>
    %c0_3 = arith.constant 0 : index
    %c0_4 = arith.constant 0 : index
    %4 = vector.load %arg3[%c0_3, %c0_4] : memref<1x8xf32, #tpu.memory_space<vmem>>, vector<1x8xf32>
    %5 = vector.broadcast %4 : vector<1x8xf32> to vector<16x8xf32>
    %6 = arith.addf %3, %5 : vector<16x8xf32>
    %cst_5 = arith.constant 5.000000e-01 : f32
    %7 = vector.broadcast %cst_5 : f32 to vector<16x8xf32>
    %8 = arith.mulf %7, %6 : vector<16x8xf32>
    %cst_6 = arith.constant 0.707106769 : f32
    %9 = vector.broadcast %cst_6 : f32 to vector<16x8xf32>
    %10 = arith.mulf %6, %9 : vector<16x8xf32>
    %11 = math.erf %10 : vector<16x8xf32>
    %cst_7 = arith.constant 1.000000e+00 : f32
    %12 = vector.broadcast %cst_7 : f32 to vector<16x8xf32>
    %13 = arith.addf %12, %11 : vector<16x8xf32>
    %14 = arith.mulf %8, %13 : vector<16x8xf32>
    %15 = arith.truncf %14 : vector<16x8xf32> to vector<16x8xbf16>
    %c0_8 = arith.constant 0 : index
    %c0_9 = arith.constant 0 : index
    %16 = vector.load %arg4[%c0_8, %c0_9] : memref<8x32xbf16, #tpu.memory_space<vmem>>, vector<8x32xbf16>
    %cst_10 = arith.constant dense<0.000000e+00> : vector<16x32xf32>
    %17 = tpu.matmul %15, %16, %cst_10 {dimension_numbers = #tpu.dot_dimension_numbers<[1], [0], [0], [1], [0, 0, 1, 1], [], []>} : vector<16x8xbf16>, vector<8x32xbf16>, vector<16x32xf32> -> vector<16x32xf32>
    %c0_11 = arith.constant 0 : index
    %c0_12 = arith.constant 0 : index
    %18 = vector.load %arg5[%c0_11, %c0_12] : memref<1x32xf32, #tpu.memory_space<vmem>>, vector<1x32xf32>
    %19 = vector.broadcast %18 : vector<1x32xf32> to vector<16x32xf32>
    %20 = arith.addf %17, %19 : vector<16x32xf32>
    %21 = arith.addf %1, %20 : vector<16x32xf32>
    %22 = arith.truncf %21 : vector<16x32xf32> to vector<16x32xbf16>
    %c0_13 = arith.constant 0 : index
    %c0_14 = arith.constant 0 : index
    %23 = vector.load %arg6[%c0_13, %c0_14] : memref<32x256xbf16, #tpu.memory_space<vmem>>, vector<32x256xbf16>
    %cst_15 = arith.constant dense<0.000000e+00> : vector<16x256xf32>
    %24 = tpu.matmul %22, %23, %cst_15 {dimension_numbers = #tpu.dot_dimension_numbers<[1], [0], [0], [1], [0, 0, 1, 1], [], []>} : vector<16x32xbf16>, vector<32x256xbf16>, vector<16x256xf32> -> vector<16x256xf32>
    %c0_16 = arith.constant 0 : index
    %c0_17 = arith.constant 0 : index
    %25 = vector.load %arg7[%c0_16, %c0_17] : memref<1x256xf32, #tpu.memory_space<vmem>>, vector<1x256xf32>
    %26 = vector.broadcast %25 : vector<1x256xf32> to vector<16x256xf32>
    %27 = arith.addf %24, %26 : vector<16x256xf32>
    %cst_18 = arith.constant 0.000000e+00 : f32
    %28 = vector.broadcast %cst_18 : f32 to vector<16x256xf32>
    %29 = arith.maximumf %27, %28 : vector<16x256xf32>
    %c0_19 = arith.constant 0 : index
    %c0_20 = arith.constant 0 : index
    %30 = vector.load %arg8[%c0_19, %c0_20] : memref<1x256xf32, #tpu.memory_space<vmem>>, vector<1x256xf32>
    %31 = vector.broadcast %30 : vector<1x256xf32> to vector<16x256xf32>
    %32 = arith.mulf %29, %31 : vector<16x256xf32>
    %cst_21 = arith.constant dense<0.000000e+00> : vector<16xf32>
    %33 = vector.multi_reduction <add>, %32, %cst_21 [1] : vector<16x256xf32> to vector<16xf32>
    %c0_22 = arith.constant 0 : index
    %c0_23 = arith.constant 0 : index
    %34 = memref.load %arg9[%c0_22, %c0_23] : memref<1x1xf32, #tpu.memory_space<smem>>
    %35 = vector.broadcast %34 : f32 to vector<16xf32>
    %36 = arith.addf %33, %35 : vector<16xf32>
    %37 = vector.shape_cast %36 : vector<16xf32> to vector<1x1x16xf32>
    %c0_24 = arith.constant 0 : index
    %c0_25 = arith.constant 0 : index
    %c0_26 = arith.constant 0 : index
    %38 = vector.load %arg10[%c0_24, %c0_25, %c0_26] : memref<1x1x16xf32, #tpu.memory_space<vmem>>, vector<1x1x16xf32>
    tpu.vector_store %arg10[%c0_24, %c0_25, %c0_26], %37 {strides = array<i32>} : memref<1x1x16xf32, #tpu.memory_space<vmem>>, vector<1x1x16xf32>,
    return
  }
  func.func @transform_0(%arg0: i32) -> (i32, i32) {
    %c0_i32 = arith.constant 0 : i32
    %c0_i32_0 = arith.constant 0 : i32
    return %arg0, %c0_i32 : i32, i32
  }
  func.func @transform_1(%arg0: i32) -> (i32, i32) {
    %c0_i32 = arith.constant 0 : i32
    %c0_i32_0 = arith.constant 0 : i32
    %c0_i32_1 = arith.constant 0 : i32
    return %c0_i32, %c0_i32_0 : i32, i32
  }
  func.func @transform_2(%arg0: i32) -> (i32, i32) {
    %c0_i32 = arith.constant 0 : i32
    %c0_i32_0 = arith.constant 0 : i32
    %c0_i32_1 = arith.constant 0 : i32
    return %c0_i32, %c0_i32_0 : i32, i32
  }
  func.func @transform_3(%arg0: i32) -> (i32, i32) {
    %c0_i32 = arith.constant 0 : i32
    %c0_i32_0 = arith.constant 0 : i32
    %c0_i32_1 = arith.constant 0 : i32
    return %c0_i32, %c0_i32_0 : i32, i32
  }
  func.func @transform_4(%arg0: i32) -> (i32, i32) {
    %c0_i32 = arith.constant 0 : i32
    %c0_i32_0 = arith.constant 0 : i32
    %c0_i32_1 = arith.constant 0 : i32
    return %c0_i32, %c0_i32_0 : i32, i32
  }
  func.func @transform_5(%arg0: i32) -> (i32, i32) {
    %c0_i32 = arith.constant 0 : i32
    %c0_i32_0 = arith.constant 0 : i32
    %c0_i32_1 = arith.constant 0 : i32
    return %c0_i32, %c0_i32_0 : i32, i32
  }
  func.func @transform_6(%arg0: i32) -> (i32, i32) {
    %c0_i32 = arith.constant 0 : i32
    %c0_i32_0 = arith.constant 0 : i32
    %c0_i32_1 = arith.constant 0 : i32
    return %c0_i32, %c0_i32_0 : i32, i32
  }
  func.func @transform_7(%arg0: i32) -> (i32, i32) {
    %c0_i32 = arith.constant 0 : i32
    %c0_i32_0 = arith.constant 0 : i32
    %c0_i32_1 = arith.constant 0 : i32
    return %c0_i32, %c0_i32_0 : i32, i32
  }
  func.func @transform_8(%arg0: i32) -> (i32, i32) {
    %c0_i32 = arith.constant 0 : i32
    %c0_i32_0 = arith.constant 0 : i32
    %c0_i32_1 = arith.constant 0 : i32
    return %c0_i32, %c0_i32_0 : i32, i32
  }
  func.func @transform_9(%arg0: i32) -> (i32, i32, i32) {
    %c0_i32 = arith.constant 0 : i32
    %c0_i32_0 = arith.constant 0 : i32
    %c0_i32_1 = arith.constant 0 : i32
    return %arg0, %c0_i32, %c0_i32_0 : i32, i32, i32
  }
}

module attributes {stable_mosaic.version = 11 : i64} {
  func.func @attr_pred_head_kernel(%arg0: i32, %arg1: memref<16x32xbf16, #tpu.memory_space<vmem>>, %arg2: memref<32x8xbf16, #tpu.memory_space<vmem>>, %arg3: memref<1x8xf32, #tpu.memory_space<vmem>>, %arg4: memref<8x32xbf16, #tpu.memory_space<vmem>>, %arg5: memref<1x32xf32, #tpu.memory_space<vmem>>, %arg6: memref<32x256xbf16, #tpu.memory_space<vmem>>, %arg7: memref<1x256xf32, #tpu.memory_space<vmem>>, %arg8: memref<1x256xf32, #tpu.memory_space<vmem>>, %arg9: memref<1x1xf32, #tpu.memory_space<smem>>, %arg10: memref<1x1x16xf32, #tpu.memory_space<vmem>>) attributes {dimension_semantics = [#tpu.dimension_semantics<parallel>], iteration_bounds = array<i64: 1>, scalar_prefetch = 0 : i64, scratch_operands = 0 : i64, tpu.core_type = #tpu.core_type<tc>, window_params = [{transform_indices = @transform_0, window_bounds = array<i64: 16, 32>}, {pipeline_mode = #tpu.pipeline_mode<synchronous>, transform_indices = @transform_1, window_bounds = array<i64: 32, 8>}, {pipeline_mode = #tpu.pipeline_mode<synchronous>, transform_indices = @transform_2, window_bounds = array<i64: 1, 8>}, {pipeline_mode = #tpu.pipeline_mode<synchronous>, transform_indices = @transform_3, window_bounds = array<i64: 8, 32>}, {pipeline_mode = #tpu.pipeline_mode<synchronous>, transform_indices = @transform_4, window_bounds = array<i64: 1, 32>}, {pipeline_mode = #tpu.pipeline_mode<synchronous>, transform_indices = @transform_5, window_bounds = array<i64: 32, 256>}, {pipeline_mode = #tpu.pipeline_mode<synchronous>, transform_indices = @transform_6, window_bounds = array<i64: 1, 256>}, {pipeline_mode = #tpu.pipeline_mode<synchronous>, transform_indices = @transform_7, window_bounds = array<i64: 1, 256>}, {transform_indices = @transform_8, window_bounds = array<i64: 1, 1>}, {transform_indices = @transform_9, window_bounds = array<i64: 1, 1, 16>}]} {
    %c0 = arith.constant 0 : index
    %c0_0 = arith.constant 0 : index
    %0 = vector.load %arg1[%c0, %c0_0] : memref<16x32xbf16, #tpu.memory_space<vmem>>, vector<16x32xbf16>
    %1 = arith.extf %0 : vector<16x32xbf16> to vector<16x32xf32>
    %c0_1 = arith.constant 0 : index
    %c0_2 = arith.constant 0 : index
    %2 = vector.load %arg2[%c0_1, %c0_2] : memref<32x8xbf16, #tpu.memory_space<vmem>>, vector<32x8xbf16>
    %cst = arith.constant dense<0.000000e+00> : vector<16x8xf32>
    %3 = tpu.matmul %0, %2, %cst {dimension_numbers = #tpu.dot_dimension_numbers<[1], [0], [0], [1], [0, 0, 1, 1], [], []>} : vector<16x32xbf16>, vector<32x8xbf16>, vector<16x8xf32> -> vector<16x8xf32>
    %c0_3 = arith.constant 0 : index
    %c0_4 = arith.constant 0 : index
    %4 = vector.load %arg3[%c0_3, %c0_4] : memref<1x8xf32, #tpu.memory_space<vmem>>, vector<1x8xf32>
    %5 = vector.broadcast %4 : vector<1x8xf32> to vector<16x8xf32>
    %6 = arith.addf %3, %5 : vector<16x8xf32>
    %cst_5 = arith.constant 5.000000e-01 : f32
    %7 = vector.broadcast %cst_5 : f32 to vector<16x8xf32>
    %8 = arith.mulf %7, %6 : vector<16x8xf32>
    %cst_6 = arith.constant 0.707106769 : f32
    %9 = vector.broadcast %cst_6 : f32 to vector<16x8xf32>
    %10 = arith.mulf %6, %9 : vector<16x8xf32>
    %11 = math.erf %10 : vector<16x8xf32>
    %cst_7 = arith.constant 1.000000e+00 : f32
    %12 = vector.broadcast %cst_7 : f32 to vector<16x8xf32>
    %13 = arith.addf %12, %11 : vector<16x8xf32>
    %14 = arith.mulf %8, %13 : vector<16x8xf32>
    %15 = arith.truncf %14 : vector<16x8xf32> to vector<16x8xbf16>
    %c0_8 = arith.constant 0 : index
    %c0_9 = arith.constant 0 : index
    %16 = vector.load %arg4[%c0_8, %c0_9] : memref<8x32xbf16, #tpu.memory_space<vmem>>, vector<8x32xbf16>
    %cst_10 = arith.constant dense<0.000000e+00> : vector<16x32xf32>
    %17 = tpu.matmul %15, %16, %cst_10 {dimension_numbers = #tpu.dot_dimension_numbers<[1], [0], [0], [1], [0, 0, 1, 1], [], []>} : vector<16x8xbf16>, vector<8x32xbf16>, vector<16x32xf32> -> vector<16x32xf32>
    %c0_11 = arith.constant 0 : index
    %c0_12 = arith.constant 0 : index
    %18 = vector.load %arg5[%c0_11, %c0_12] : memref<1x32xf32, #tpu.memory_space<vmem>>, vector<1x32xf32>
    %19 = vector.broadcast %18 : vector<1x32xf32> to vector<16x32xf32>
    %20 = arith.addf %17, %19 : vector<16x32xf32>
    %21 = arith.addf %1, %20 : vector<16x32xf32>
    %22 = arith.truncf %21 : vector<16x32xf32> to vector<16x32xbf16>
    %c0_13 = arith.constant 0 : index
    %c0_14 = arith.constant 0 : index
    %23 = vector.load %arg6[%c0_13, %c0_14] : memref<32x256xbf16, #tpu.memory_space<vmem>>, vector<32x256xbf16>
    %cst_15 = arith.constant dense<0.000000e+00> : vector<16x256xf32>
    %24 = tpu.matmul %22, %23, %cst_15 {dimension_numbers = #tpu.dot_dimension_numbers<[1], [0], [0], [1], [0, 0, 1, 1], [], []>} : vector<16x32xbf16>, vector<32x256xbf16>, vector<16x256xf32> -> vector<16x256xf32>
    %c0_16 = arith.constant 0 : index
    %c0_17 = arith.constant 0 : index
    %25 = vector.load %arg7[%c0_16, %c0_17] : memref<1x256xf32, #tpu.memory_space<vmem>>, vector<1x256xf32>
    %26 = vector.broadcast %25 : vector<1x256xf32> to vector<16x256xf32>
    %27 = arith.addf %24, %26 : vector<16x256xf32>
    %cst_18 = arith.constant 0.000000e+00 : f32
    %28 = vector.broadcast %cst_18 : f32 to vector<16x256xf32>
    %29 = arith.maximumf %27, %28 : vector<16x256xf32>
    %c0_19 = arith.constant 0 : index
    %c0_20 = arith.constant 0 : index
    %30 = vector.load %arg8[%c0_19, %c0_20] : memref<1x256xf32, #tpu.memory_space<vmem>>, vector<1x256xf32>
    %31 = vector.broadcast %30 : vector<1x256xf32> to vector<16x256xf32>
    %32 = arith.mulf %29, %31 : vector<16x256xf32>
    %cst_21 = arith.constant dense<0.000000e+00> : vector<16xf32>
    %33 = vector.multi_reduction <add>, %32, %cst_21 [1] : vector<16x256xf32> to vector<16xf32>
    %c0_22 = arith.constant 0 : index
    %c0_23 = arith.constant 0 : index
    %34 = memref.load %arg9[%c0_22, %c0_23] : memref<1x1xf32, #tpu.memory_space<smem>>
    %35 = vector.broadcast %34 : f32 to vector<16xf32>
    %36 = arith.addf %33, %35 : vector<16xf32>
    %37 = vector.shape_cast %36 : vector<16xf32> to vector<1x1x16xf32>
    %c0_24 = arith.constant 0 : index
    %c0_25 = arith.constant 0 : index
    %c0_26 = arith.constant 0 : index
    %38 = vector.load %arg10[%c0_24, %c0_25, %c0_26] : memref<1x1x16xf32, #tpu.memory_space<vmem>>, vector<1x1x16xf32>
    tpu.vector_store %arg10[%c0_24, %c0_25, %c0_26], %37 {strides = array<i32>} : memref<1x1x16xf32, #tpu.memory_space<vmem>>, vector<1x1x16xf32>,
    return
  }
  func.func @transform_0(%arg0: i32) -> (i32, i32) {
    %c0_i32 = arith.constant 0 : i32
    %c0_i32_0 = arith.constant 0 : i32
    return %arg0, %c0_i32 : i32, i32
  }
  func.func @transform_1(%arg0: i32) -> (i32, i32) {
    %c0_i32 = arith.constant 0 : i32
    %c0_i32_0 = arith.constant 0 : i32
    %c0_i32_1 = arith.constant 0 : i32
    return %c0_i32, %c0_i32_0 : i32, i32
  }
  func.func @transform_2(%arg0: i32) -> (i32, i32) {
    %c0_i32 = arith.constant 0 : i32
    %c0_i32_0 = arith.constant 0 : i32
    %c0_i32_1 = arith.constant 0 : i32
    return %c0_i32, %c0_i32_0 : i32, i32
  }
  func.func @transform_3(%arg0: i32) -> (i32, i32) {
    %c0_i32 = arith.constant 0 : i32
    %c0_i32_0 = arith.constant 0 : i32
    %c0_i32_1 = arith.constant 0 : i32
    return %c0_i32, %c0_i32_0 : i32, i32
  }
  func.func @transform_4(%arg0: i32) -> (i32, i32) {
    %c0_i32 = arith.constant 0 : i32
    %c0_i32_0 = arith.constant 0 : i32
    %c0_i32_1 = arith.constant 0 : i32
    return %c0_i32, %c0_i32_0 : i32, i32
  }
  func.func @transform_5(%arg0: i32) -> (i32, i32) {
    %c0_i32 = arith.constant 0 : i32
    %c0_i32_0 = arith.constant 0 : i32
    %c0_i32_1 = arith.constant 0 : i32
    return %c0_i32, %c0_i32_0 : i32, i32
  }
  func.func @transform_6(%arg0: i32) -> (i32, i32) {
    %c0_i32 = arith.constant 0 : i32
    %c0_i32_0 = arith.constant 0 : i32
    %c0_i32_1 = arith.constant 0 : i32
    return %c0_i32, %c0_i32_0 : i32, i32
  }
  func.func @transform_7(%arg0: i32) -> (i32, i32) {
    %c0_i32 = arith.constant 0 : i32
    %c0_i32_0 = arith.constant 0 : i32
    %c0_i32_1 = arith.constant 0 : i32
    return %c0_i32, %c0_i32_0 : i32, i32
  }
  func.func @transform_8(%arg0: i32) -> (i32, i32) {
    %c0_i32 = arith.constant 0 : i32
    %c0_i32_0 = arith.constant 0 : i32
    %c0_i32_1 = arith.constant 0 : i32
    return %c0_i32, %c0_i32_0 : i32, i32
  }
  func.func @transform_9(%arg0: i32) -> (i32, i32, i32) {
    %c0_i32 = arith.constant 0 : i32
    %c0_i32_0 = arith.constant 0 : i32
    %c0_i32_1 = arith.constant 0 : i32
    return %arg0, %c0_i32, %c0_i32_0 : i32, i32, i32
  }
}

</mosaic_0001>

<llo_original>
// kernel: tpu_custom_call.1
$region0: #{tpu_custom_call.1}
  #allocation0 [shape = 'u32[]', space=smem, size = 0x4, offset = 0x4, fixed_abs, tag = 'smem constant byte address 0x4 - core index']
  #allocation1 [shape = 'u32[144,128]{1,0:T(1,128)}', space=vmem, size = 0x12000, scoped, tag = 'internal scratch']
  #allocation2 [shape = 'f32[1,1]{1,0:T(1,128)S(6)}', space=smem, size = 0x200, scoped, tag = 'scoped memory for tpu_custom_call.1']
  %s0 = inlined_call_operand.vmem [shape: bf16[16,32], index: 0, kind: input, shape index: {}]
  %s1 = inlined_call_operand.vmem [shape: bf16[32,8], index: 1, kind: input, shape index: {}]
  %s2 = inlined_call_operand.hbm [shape: f32[1,8], index: 2, kind: input, shape index: {}]
  %s3 = inlined_call_operand.hbm [shape: bf16[8,32], index: 3, kind: input, shape index: {}]
  %s4 = inlined_call_operand.hbm [shape: f32[1,32], index: 4, kind: input, shape index: {}]
  %s5 = inlined_call_operand.vmem [shape: bf16[32,256], index: 5, kind: input, shape index: {}]
  %s6 = inlined_call_operand.vmem [shape: f32[1,256], index: 6, kind: input, shape index: {}]
  %s7 = inlined_call_operand.vmem [shape: f32[1,256], index: 7, kind: input, shape index: {}]
  %s8 = inlined_call_operand.<no memory space> [shape: f32[1,1], index: 8, kind: input, shape index: {}]
  %s9 = inlined_call_operand.hbm [shape: f32[1,1,16], index: 9, kind: output, shape index: {}]
  %s10 = sld [smem:[#allocation0]]
  $region58: #{tpu_custom_call.1} parent=0
    _
  %s12 = ssub.s32 1, %s10
  %s13 = scalar_select 0, %s12, %s10
  %14 = sst [smem:[#allocation2]] %s8
  $region1: #{tpu_custom_call.1} parent=0
    #allocation3 [shape = 'u8[512]{0}', space=vmem, size = 0x400, scoped, tag = 'input window, operand 2, single buffered']
    #allocation4 [shape = 's32[1]{0}', space=sflag, size = 0x4, scoped, tag = 'scoped memory for tpu_custom_call.1']
    #allocation5 [shape = 's32[1]{0}', space=sflag, size = 0x4, scoped, tag = 'scoped memory for tpu_custom_call.1']
    #allocation6 [shape = 'u8[2048]{0}', space=vmem, size = 0x800, scoped, tag = 'input window, operand 3, single buffered']
    #allocation7 [shape = 's32[1]{0}', space=sflag, size = 0x4, scoped, tag = 'scoped memory for tpu_custom_call.1']
    #allocation8 [shape = 'u8[512]{0}', space=vmem, size = 0x400, scoped, tag = 'input window, operand 4, single buffered']
    #allocation9 [shape = 'u8[512]{0}', space=vmem, size = 0x400, scoped, tag = 'output window, operand 0, single buffered']
    %15 = vsyncpa [#allocation4], 0
    %16 = vsyncpa [#allocation7], 0
    %17 = vsyncpa [#allocation5], 0
    // Predicated region
    $region2: #{tpu_custom_call.1} parent=1 // pred_check
      _
    $region3: #{tpu_custom_call.1} parent=1 // pred_check_branch
      %19 = sbr.rel (0) target = $region5
    $region4: #{tpu_custom_call.1} parent=1 // pred_region
      _
    $region5: #{tpu_custom_call.1} parent=1 // pred_fallthru
      _
    // Predicated region
    $region6: #{tpu_custom_call.1} parent=1 // pred_check
      _
    $region7: #{tpu_custom_call.1} parent=1 // pred_check_branch
      %21 = sbr.rel (0) target = $region9
    $region8: #{tpu_custom_call.1} parent=1 // pred_region
      _
    $region9: #{tpu_custom_call.1} parent=1 // pred_fallthru
      _
    // Predicated region
    $region10: #{tpu_custom_call.1} parent=1 // pred_check
      _
    $region11: #{tpu_custom_call.1} parent=1 // pred_check_branch
      %23 = sbr.rel (0) target = $region13
    $region12: #{tpu_custom_call.1} parent=1 // pred_region
      %s25 = ssub.s32 16, 16
      %26 = vsyncadd [#allocation4], %s25
      %s28 = sshll.u32 [#allocation3], 4
      %s29 = int_to_ptr.vmem [resolvable:$true] %s28
      %31 = dma.hbm_to_vmem [thread:$0]  %s2, 16, %s29, [#allocation4]
    $region13: #{tpu_custom_call.1} parent=1 // pred_fallthru
      _
    // Predicated region
    $region14: #{tpu_custom_call.1} parent=1 // pred_check
      _
    $region15: #{tpu_custom_call.1} parent=1 // pred_check_branch
      %33 = sbr.rel (0) target = $region17
    $region16: #{tpu_custom_call.1} parent=1 // pred_region
      %s35 = ssub.s32 64, 64
      %36 = vsyncadd [#allocation7], %s35
      %s38 = sshll.u32 [#allocation6], 4
      %s39 = int_to_ptr.vmem [resolvable:$true] %s38
      %41 = dma.hbm_to_vmem [thread:$0]  %s3, 64, %s39, [#allocation7]
    $region17: #{tpu_custom_call.1} parent=1 // pred_fallthru
      _
    // Predicated region
    $region18: #{tpu_custom_call.1} parent=1 // pred_check
      _
    $region19: #{tpu_custom_call.1} parent=1 // pred_check_branch
      %43 = sbr.rel (0) target = $region21
    $region20: #{tpu_custom_call.1} parent=1 // pred_region
      %s45 = ssub.s32 16, 16
      %46 = vsyncadd [#allocation7], %s45
      %s48 = sshll.u32 [#allocation8], 4
      %s49 = int_to_ptr.vmem [resolvable:$true] %s48
      %51 = dma.hbm_to_vmem [thread:$0]  %s4, 16, %s49, [#allocation7]
    $region21: #{tpu_custom_call.1} parent=1 // pred_fallthru
      _
    // Predicated region
    $region22: #{tpu_custom_call.1} parent=1 // pred_check
      _
    $region23: #{tpu_custom_call.1} parent=1 // pred_check_branch
      %53 = sbr.rel (0) target = $region25
    $region24: #{tpu_custom_call.1} parent=1 // pred_region
      _
    $region25: #{tpu_custom_call.1} parent=1 // pred_fallthru
      _
    // Predicated region
    $region26: #{tpu_custom_call.1} parent=1 // pred_check
      _
    $region27: #{tpu_custom_call.1} parent=1 // pred_check_branch
      %55 = sbr.rel (0) target = $region29
    $region28: #{tpu_custom_call.1} parent=1 // pred_region
      _
    $region29: #{tpu_custom_call.1} parent=1 // pred_fallthru
      _
    // Predicated region
    $region30: #{tpu_custom_call.1} parent=1 // pred_check
      _
    $region31: #{tpu_custom_call.1} parent=1 // pred_check_branch
      %57 = sbr.rel (0) target = $region33
    $region32: #{tpu_custom_call.1} parent=1 // pred_region
      _
    $region33: #{tpu_custom_call.1} parent=1 // pred_fallthru
      _
    // Predicated region
    $region34: #{tpu_custom_call.1} parent=1 // pred_check
      _
    $region35: #{tpu_custom_call.1} parent=1 // pred_check_branch
      %59 = sbr.rel (0) target = $region37
    $region36: #{tpu_custom_call.1} parent=1 // pred_region
      _
    $region37: #{tpu_custom_call.1} parent=1 // pred_fallthru
      _
    // Predicated region
    $region38: #{tpu_custom_call.1} parent=1 // pred_check
      _
    $region39: #{tpu_custom_call.1} parent=1 // pred_check_branch
      %61 = sbr.rel (0) target = $region41
    $region40: #{tpu_custom_call.1} parent=1 // pred_region
      %62 = dma.done [#allocation4], 16
    $region41: #{tpu_custom_call.1} parent=1 // pred_fallthru
      _
    // Predicated region
    $region42: #{tpu_custom_call.1} parent=1 // pred_check
      _
    $region43: #{tpu_custom_call.1} parent=1 // pred_check_branch
      %64 = sbr.rel (0) target = $region45
    $region44: #{tpu_custom_call.1} parent=1 // pred_region
      %65 = dma.done [#allocation7], 64
    $region45: #{tpu_custom_call.1} parent=1 // pred_fallthru
      _
    // Predicated region
    $region46: #{tpu_custom_call.1} parent=1 // pred_check
      _
    $region47: #{tpu_custom_call.1} parent=1 // pred_check_branch
      %67 = sbr.rel (0) target = $region49
    $region48: #{tpu_custom_call.1} parent=1 // pred_region
      %68 = dma.done [#allocation7], 16
    $region49: #{tpu_custom_call.1} parent=1 // pred_fallthru
      _
    %v70 = vld [vmem:[%s0] sm:$0xf]
    %v71 = vld [vmem:[%s0 + $0x4] sm:$0xf]
    %v72 = vunpack.c.l.bf16 %v70
    %v73 = vunpack.c.l.bf16 %v71
    %v74 = vld [vmem:[%s1] sm:$0xf]
    %v75 = vld [vmem:[%s1 + $0x4] sm:$0xf]
    %v76 = vld [vmem:[%s1 + $0x8] sm:$0xf]
    %v77 = vld [vmem:[%s1 + $0xc] sm:$0xf]
    %v78 = vld [vmem:[#allocation3] sm:$0x1]
    %v80 = vlaneseq
    %v81 = vshrl.u32 %v80, 7
    %v82 = vsub.s32 0, %v81
    %v83 = vrot.slane %v78, %v82
    %v87 = vunpack.c.l.b16 %v70
    %v88 = vunpack.c.l.b16 %v71
    %v89 = vpack.c.b16 %v88, %v87
    %v94 = vunpack.c.l.b16 %v74
    %v95 = vunpack.c.l.b16 %v75
    %v96 = vunpack.c.l.b16 %v76
    %v97 = vunpack.c.l.b16 %v77
    %v98 = vpack.c.b16 %v95, %v94
    %v99 = vpack.c.b16 %v97, %v96
    %vm102 = vcmask 261120
    %v104 = vsel %vm102, %v89, 0
    %106 = vmatprep.subr.bf16.mxu0 0
    %107 = vmatpush1.bf16.msra.mxu0 %v98
    %108 = vmatprep.subr.bf16.mxu0 0
    %109 = vmatpush1.bf16.msra.mxu0 %v99
    %110 = vmatprep.subr.bf16.mxu0 0
    %111 = vmatpush1.bf16.msra.mxu0 0
    %112 = vmatprep.subr.bf16.mxu0 0
    %113 = vmatpush1.bf16.msra.mxu0 0
    %114 = vmatprep.subr.bf16.mxu0 0
    %115 = vmatpush1.bf16.msra.mxu0 0
    %116 = vmatprep.subr.bf16.mxu0 0
    %117 = vmatpush1.bf16.msra.mxu0 0
    %118 = vmatprep.subr.bf16.mxu0 0
    %119 = vmatpush1.bf16.msra.mxu0 0
    %120 = vmatprep.subr.bf16.mxu0 0
    %121 = vmatpush1.bf16.msra.mxu0 0
    %122 = vmatprep.subr.bf16.mxu0 0
    %123 = vmatpush1.bf16.msra.mxu0 0
    %124 = vmatprep.subr.bf16.mxu0 0
    %125 = vmatpush1.bf16.msra.mxu0 0
    %126 = vmatprep.subr.bf16.mxu0 0
    %127 = vmatpush1.bf16.msra.mxu0 0
    %128 = vmatprep.subr.bf16.mxu0 0
    %129 = vmatpush1.bf16.msra.mxu0 0
    %130 = vmatprep.subr.bf16.mxu0 0
    %131 = vmatpush1.bf16.msra.mxu0 0
    %132 = vmatprep.subr.bf16.mxu0 0
    %133 = vmatpush1.bf16.msra.mxu0 0
    %134 = vmatprep.subr.bf16.mxu0 0
    %135 = vmatpush1.bf16.msra.mxu0 0
    %136 = vmatprep.subr.bf16.mxu0 0
    %137 = vmatpush1.bf16.msra.mxu0 0
    %138 = vmatprep.mubr.bf16.mxu0 0
    %139 = vmatmul.mubr.bf16.gmra.mrb[0].mxu0 %v104
    %v140 = vpop.f32.mrb[0].mxu0
    %v141 = vadd.f32 %v83, %v140
    %v142 = vpop.f32.mrb[0].mxu0
    %v143 = vpop.f32.mrb[0].mxu0
    %v144 = vadd.f32 %v83, %v143
    %v145 = vpop.f32.mrb[0].mxu0
    %146 = vdwg.mxu0
    %v147 = vmul.f32 %v141, 0.5
    %v148 = vmul.f32 %v144, 0.5
    %v149 = vmul.f32 %v141, 0.70710677
    %v150 = vmul.f32 %v144, 0.70710677
    %v151 = verf.f32.pop %v149
    %v152 = verf.f32.pop %v150
    %v153 = vadd.f32 %v151, 1.0
    %v154 = vadd.f32 %v152, 1.0
    %v155 = vmul.f32 %v147, %v153
    %v156 = vmul.f32 %v148, %v154
    %v157 = vpack.c.bf16 %v156, %v155
    %v158 = vld [vmem:[#allocation6] sm:$0xf]
    %v159 = vld [vmem:[#allocation8] sm:$0x1]
    %v161 = vlaneseq
    %v162 = vshrl.u32 %v161, 7
    %v163 = vsub.s32 0, %v162
    %v164 = vrot.slane %v159, %v163
    %vm166 = vcmask 64512
    %v168 = vsel %vm166, %v157, 0
    %vm170 = vcmask 1043456
    %v172 = vsel %vm170, %v158, 0
    %174 = vmatprep.subr.bf16.mxu0 0
    %175 = vmatpush1.bf16.msra.mxu0 %v172
    %176 = vmatprep.subr.bf16.mxu0 0
    %177 = vmatpush1.bf16.msra.mxu0 0
    %178 = vmatprep.subr.bf16.mxu0 0
    %179 = vmatpush1.bf16.msra.mxu0 0
    %180 = vmatprep.subr.bf16.mxu0 0
    %181 = vmatpush1.bf16.msra.mxu0 0
    %182 = vmatprep.subr.bf16.mxu0 0
    %183 = vmatpush1.bf16.msra.mxu0 0
    %184 = vmatprep.subr.bf16.mxu0 0
    %185 = vmatpush1.bf16.msra.mxu0 0
    %186 = vmatprep.subr.bf16.mxu0 0
    %187 = vmatpush1.bf16.msra.mxu0 0
    %188 = vmatprep.subr.bf16.mxu0 0
    %189 = vmatpush1.bf16.msra.mxu0 0
    %190 = vmatprep.subr.bf16.mxu0 0
    %191 = vmatpush1.bf16.msra.mxu0 0
    %192 = vmatprep.subr.bf16.mxu0 0
    %193 = vmatpush1.bf16.msra.mxu0 0
    %194 = vmatprep.subr.bf16.mxu0 0
    %195 = vmatpush1.bf16.msra.mxu0 0
    %196 = vmatprep.subr.bf16.mxu0 0
    %197 = vmatpush1.bf16.msra.mxu0 0
    %198 = vmatprep.subr.bf16.mxu0 0
    %199 = vmatpush1.bf16.msra.mxu0 0
    %200 = vmatprep.subr.bf16.mxu0 0
    %201 = vmatpush1.bf16.msra.mxu0 0
    %202 = vmatprep.subr.bf16.mxu0 0
    %203 = vmatpush1.bf16.msra.mxu0 0
    %204 = vmatprep.subr.bf16.mxu0 0
    %205 = vmatpush1.bf16.msra.mxu0 0
    %206 = vmatprep.mubr.bf16.mxu0 0
    %207 = vmatmul.mubr.bf16.gmra.mrb[0].mxu0 %v168
    %v208 = vpop.f32.mrb[0].mxu0
    %v209 = vadd.f32 %v164, %v208
    %v210 = vpop.f32.mrb[0].mxu0
    %v211 = vpop.f32.mrb[0].mxu0
    %v212 = vadd.f32 %v164, %v211
    %v213 = vpop.f32.mrb[0].mxu0
    %214 = vdwg.mxu0
    %v215 = vadd.f32 %v72, %v209
    %v216 = vadd.f32 %v73, %v212
    %v217 = vpack.c.bf16 %v216, %v215
    %v218 = vld [vmem:[%s5] sm:$0xff]
    %v219 = vld [vmem:[%s5 + $0x8] sm:$0xff]
    %v220 = vld [vmem:[%s5 + $0x10] sm:$0xff]
    %v221 = vld [vmem:[%s5 + $0x18] sm:$0xff]
    %v222 = vld [vmem:[%s6] sm:$0x3]
    %v224 = vlaneseq
    %v225 = vshrl.u32 %v224, 7
    %v226 = vsub.s32 0, %v225
    %v227 = vrot.slane %v222, %v226
    %v228 = vlaneseq
    %v229 = vshrl.u32 %v228, 7
    %v230 = vsub.s32 1, %v229
    %v231 = vrot.slane %v222, %v230
    %v238 = vunpack.c.l.b16 %v218
    %v239 = vunpack.c.h.b16 %v218
    %v240 = vunpack.c.l.b16 %v219
    %v241 = vunpack.c.h.b16 %v219
    %v242 = vunpack.c.l.b16 %v220
    %v243 = vunpack.c.h.b16 %v220
    %v244 = vunpack.c.l.b16 %v221
    %v245 = vunpack.c.h.b16 %v221
    %v246 = vpack.c.b16 %v240, %v238
    %v247 = vpack.c.b16 %v241, %v239
    %v248 = vpack.c.b16 %v244, %v242
    %v249 = vpack.c.b16 %v245, %v243
    %v255 = vsel %vm102, %v217, 0
    %257 = vmatprep.subr.bf16.mxu0 %v247
    %258 = vmatpush1.bf16.msra.mxu0 %v246
    %259 = vmatprep.subr.bf16.mxu0 %v249
    %260 = vmatpush1.bf16.msra.mxu0 %v248
    %261 = vmatprep.subr.bf16.mxu0 0
    %262 = vmatpush1.bf16.msra.mxu0 0
    %263 = vmatprep.subr.bf16.mxu0 0
    %264 = vmatpush1.bf16.msra.mxu0 0
    %265 = vmatprep.subr.bf16.mxu0 0
    %266 = vmatpush1.bf16.msra.mxu0 0
    %267 = vmatprep.subr.bf16.mxu0 0
    %268 = vmatpush1.bf16.msra.mxu0 0
    %269 = vmatprep.subr.bf16.mxu0 0
    %270 = vmatpush1.bf16.msra.mxu0 0
    %271 = vmatprep.subr.bf16.mxu0 0
    %272 = vmatpush1.bf16.msra.mxu0 0
    %273 = vmatprep.subr.bf16.mxu0 0
    %274 = vmatpush1.bf16.msra.mxu0 0
    %275 = vmatprep.subr.bf16.mxu0 0
    %276 = vmatpush1.bf16.msra.mxu0 0
    %277 = vmatprep.subr.bf16.mxu0 0
    %278 = vmatpush1.bf16.msra.mxu0 0
    %279 = vmatprep.subr.bf16.mxu0 0
    %280 = vmatpush1.bf16.msra.mxu0 0
    %281 = vmatprep.subr.bf16.mxu0 0
    %282 = vmatpush1.bf16.msra.mxu0 0
    %283 = vmatprep.subr.bf16.mxu0 0
    %284 = vmatpush1.bf16.msra.mxu0 0
    %285 = vmatprep.subr.bf16.mxu0 0
    %286 = vmatpush1.bf16.msra.mxu0 0
    %287 = vmatprep.subr.bf16.mxu0 0
    %288 = vmatpush1.bf16.msra.mxu0 0
    %289 = vmatprep.mubr.bf16.mxu0 0
    %290 = vmatmul.mubr.bf16.gmra.mrb[0].mxu0 %v255
    %v291 = vpop.f32.mrb[0].mxu0
    %v292 = vadd.f32 %v227, %v291
    %v293 = vpop.f32.mrb[0].mxu0
    %v294 = vadd.f32 %v231, %v293
    %v295 = vpop.f32.mrb[0].mxu0
    %v296 = vadd.f32 %v227, %v295
    %v297 = vpop.f32.mrb[0].mxu0
    %v298 = vadd.f32 %v231, %v297
    %299 = vdwg.mxu0
    %v300 = vmax.f32 %v292, 0.0
    %v301 = vmax.f32 %v294, 0.0
    %v302 = vmax.f32 %v296, 0.0
    %v303 = vmax.f32 %v298, 0.0
    %v304 = vld [vmem:[%s7] sm:$0x3]
    %v306 = vlaneseq
    %v307 = vshrl.u32 %v306, 7
    %v308 = vsub.s32 0, %v307
    %v309 = vrot.slane %v304, %v308
    %v310 = vlaneseq
    %v311 = vshrl.u32 %v310, 7
    %v312 = vsub.s32 1, %v311
    %v313 = vrot.slane %v304, %v312
    %v316 = vmul.f32 %v300, %v309
    %v317 = vmul.f32 %v301, %v313
    %v318 = vmul.f32 %v302, %v309
    %v319 = vmul.f32 %v303, %v313
    %v320 = vadd.f32 %v316, %v317
    %321 = vadd.xlane.f32.xlu0 %v320
    %v322 = vpop.xlane.xlu0 %321
    %v323 = vadd.f32 %v318, %v319
    %324 = vadd.xlane.f32.xlu0 %v323
    %v325 = vpop.xlane.xlu0 %324
    %s326 = sld [smem:[#allocation2]]
    %v327 = vstv %s326
    %v328 = vadd.f32 %v322, %v327
    %v329 = vadd.f32 %v325, %v327
    %v332 = vlaneseq
    %v333 = vand.u32 %v332, 127
    %v334 = vlaneseq
    %v335 = vshrl.u32 %v334, 7
    %v336 = vsub.s32 %v333, %v335
    %v337 = vrot.slane %v328, %v336
    %v338 = vadd.s32 %v333, 4294967288
    %v339 = vlaneseq
    %v340 = vshrl.u32 %v339, 7
    %v341 = vsub.s32 %v338, %v340
    %v342 = vrot.slane %v329, %v341
    %vm343 = vcmask 130112
    %v344 = vsel %vm343, %v342, %v337
    %vm346 = vcmask 122880
    %347 = vst.msk [vmem:[#allocation9] sm:$0x1] %vm346, %v344
    // Predicated region
    $region50: #{tpu_custom_call.1} parent=1 // pred_check
      _
    $region51: #{tpu_custom_call.1} parent=1 // pred_check_branch
      %349 = sbr.rel (0) target = $region53
    $region52: #{tpu_custom_call.1} parent=1 // pred_region
      %s351 = ssub.s32 16, 16
      %352 = vsyncadd [#allocation5], %s351
      %s354 = sshll.u32 [#allocation9], 4
      %s355 = int_to_ptr.vmem [resolvable:$true] %s354
      %357 = dma.vmem_to_hbm [thread:$0]  %s355, 16, %s9, [#allocation5]
    $region53: #{tpu_custom_call.1} parent=1 // pred_fallthru
      _
    // Predicated region
    $region54: #{tpu_custom_call.1} parent=1 // pred_check
      _
    $region55: #{tpu_custom_call.1} parent=1 // pred_check_branch
      %359 = sbr.rel (0) target = $region57
    $region56: #{tpu_custom_call.1} parent=1 // pred_region
      %360 = dma.done [#allocation5], 16
    $region57: #{tpu_custom_call.1} parent=1 // pred_fallthru
      _
    %361 = vsyncpa [#allocation4], 1
    %362 = vsyncpa [#allocation7], 1
    %363 = vsyncpa [#allocation5], 1

// kernel: tpu_custom_call.1
$region0: #{tpu_custom_call.1}
  #allocation0 [shape = 'u32[]', space=smem, size = 0x4, offset = 0x4, fixed_abs, tag = 'smem constant byte address 0x4 - core index']
  #allocation1 [shape = 'u32[144,128]{1,0:T(1,128)}', space=vmem, size = 0x12000, scoped, tag = 'internal scratch']
  #allocation2 [shape = 'f32[1,1]{1,0:T(1,128)S(6)}', space=smem, size = 0x200, scoped, tag = 'scoped memory for tpu_custom_call.1']
  %s0 = inlined_call_operand.vmem [shape: bf16[16,32], index: 0, kind: input, shape index: {}]
  %s1 = inlined_call_operand.vmem [shape: bf16[32,8], index: 1, kind: input, shape index: {}]
  %s2 = inlined_call_operand.hbm [shape: f32[1,8], index: 2, kind: input, shape index: {}]
  %s3 = inlined_call_operand.hbm [shape: bf16[8,32], index: 3, kind: input, shape index: {}]
  %s4 = inlined_call_operand.hbm [shape: f32[1,32], index: 4, kind: input, shape index: {}]
  %s5 = inlined_call_operand.vmem [shape: bf16[32,256], index: 5, kind: input, shape index: {}]
  %s6 = inlined_call_operand.vmem [shape: f32[1,256], index: 6, kind: input, shape index: {}]
  %s7 = inlined_call_operand.vmem [shape: f32[1,256], index: 7, kind: input, shape index: {}]
  %s8 = inlined_call_operand.<no memory space> [shape: f32[1,1], index: 8, kind: input, shape index: {}]
  %s9 = inlined_call_operand.hbm [shape: f32[1,1,16], index: 9, kind: output, shape index: {}]
  %s10 = sld [smem:[#allocation0]]
  $region58: #{tpu_custom_call.1} parent=0
    _
  %s12 = ssub.s32 1, %s10
  %s13 = scalar_select 0, %s12, %s10
  %14 = sst [smem:[#allocation2]] %s8
  $region1: #{tpu_custom_call.1} parent=0
    #allocation3 [shape = 'u8[512]{0}', space=vmem, size = 0x400, scoped, tag = 'input window, operand 2, single buffered']
    #allocation4 [shape = 's32[1]{0}', space=sflag, size = 0x4, scoped, tag = 'scoped memory for tpu_custom_call.1']
    #allocation5 [shape = 's32[1]{0}', space=sflag, size = 0x4, scoped, tag = 'scoped memory for tpu_custom_call.1']
    #allocation6 [shape = 'u8[2048]{0}', space=vmem, size = 0x800, scoped, tag = 'input window, operand 3, single buffered']
    #allocation7 [shape = 's32[1]{0}', space=sflag, size = 0x4, scoped, tag = 'scoped memory for tpu_custom_call.1']
    #allocation8 [shape = 'u8[512]{0}', space=vmem, size = 0x400, scoped, tag = 'input window, operand 4, single buffered']
    #allocation9 [shape = 'u8[512]{0}', space=vmem, size = 0x400, scoped, tag = 'output window, operand 0, single buffered']
    %15 = vsyncpa [#allocation4], 0
    %16 = vsyncpa [#allocation7], 0
    %17 = vsyncpa [#allocation5], 0
    // Predicated region
    $region2: #{tpu_custom_call.1} parent=1 // pred_check
      _
    $region3: #{tpu_custom_call.1} parent=1 // pred_check_branch
      %19 = sbr.rel (0) target = $region5
    $region4: #{tpu_custom_call.1} parent=1 // pred_region
      _
    $region5: #{tpu_custom_call.1} parent=1 // pred_fallthru
      _
    // Predicated region
    $region6: #{tpu_custom_call.1} parent=1 // pred_check
      _
    $region7: #{tpu_custom_call.1} parent=1 // pred_check_branch
      %21 = sbr.rel (0) target = $region9
    $region8: #{tpu_custom_call.1} parent=1 // pred_region
      _
    $region9: #{tpu_custom_call.1} parent=1 // pred_fallthru
      _
    // Predicated region
    $region10: #{tpu_custom_call.1} parent=1 // pred_check
      _
    $region11: #{tpu_custom_call.1} parent=1 // pred_check_branch
      %23 = sbr.rel (0) target = $region13
    $region12: #{tpu_custom_call.1} parent=1 // pred_region
      %s25 = ssub.s32 16, 16
      %26 = vsyncadd [#allocation4], %s25
      %s28 = sshll.u32 [#allocation3], 4
      %s29 = int_to_ptr.vmem [resolvable:$true] %s28
      %31 = dma.hbm_to_vmem [thread:$0]  %s2, 16, %s29, [#allocation4]
    $region13: #{tpu_custom_call.1} parent=1 // pred_fallthru
      _
    // Predicated region
    $region14: #{tpu_custom_call.1} parent=1 // pred_check
      _
    $region15: #{tpu_custom_call.1} parent=1 // pred_check_branch
      %33 = sbr.rel (0) target = $region17
    $region16: #{tpu_custom_call.1} parent=1 // pred_region
      %s35 = ssub.s32 64, 64
      %36 = vsyncadd [#allocation7], %s35
      %s38 = sshll.u32 [#allocation6], 4
      %s39 = int_to_ptr.vmem [resolvable:$true] %s38
      %41 = dma.hbm_to_vmem [thread:$0]  %s3, 64, %s39, [#allocation7]
    $region17: #{tpu_custom_call.1} parent=1 // pred_fallthru
      _
    // Predicated region
    $region18: #{tpu_custom_call.1} parent=1 // pred_check
      _
    $region19: #{tpu_custom_call.1} parent=1 // pred_check_branch
      %43 = sbr.rel (0) target = $region21
    $region20: #{tpu_custom_call.1} parent=1 // pred_region
      %s45 = ssub.s32 16, 16
      %46 = vsyncadd [#allocation7], %s45
      %s48 = sshll.u32 [#allocation8], 4
      %s49 = int_to_ptr.vmem [resolvable:$true] %s48
      %51 = dma.hbm_to_vmem [thread:$0]  %s4, 16, %s49, [#allocation7]
    $region21: #{tpu_custom_call.1} parent=1 // pred_fallthru
      _
    // Predicated region
    $region22: #{tpu_custom_call.1} parent=1 // pred_check
      _
    $region23: #{tpu_custom_call.1} parent=1 // pred_check_branch
      %53 = sbr.rel (0) target = $region25
    $region24: #{tpu_custom_call.1} parent=1 // pred_region
      _
    $region25: #{tpu_custom_call.1} parent=1 // pred_fallthru
      _
    // Predicated region
    $region26: #{tpu_custom_call.1} parent=1 // pred_check
      _
    $region27: #{tpu_custom_call.1} parent=1 // pred_check_branch
      %55 = sbr.rel (0) target = $region29
    $region28: #{tpu_custom_call.1} parent=1 // pred_region
      _
    $region29: #{tpu_custom_call.1} parent=1 // pred_fallthru
      _
    // Predicated region
    $region30: #{tpu_custom_call.1} parent=1 // pred_check
      _
    $region31: #{tpu_custom_call.1} parent=1 // pred_check_branch
      %57 = sbr.rel (0) target = $region33
    $region32: #{tpu_custom_call.1} parent=1 // pred_region
      _
    $region33: #{tpu_custom_call.1} parent=1 // pred_fallthru
      _
    // Predicated region
    $region34: #{tpu_custom_call.1} parent=1 // pred_check
      _
    $region35: #{tpu_custom_call.1} parent=1 // pred_check_branch
      %59 = sbr.rel (0) target = $region37
    $region36: #{tpu_custom_call.1} parent=1 // pred_region
      _
    $region37: #{tpu_custom_call.1} parent=1 // pred_fallthru
      _
    // Predicated region
    $region38: #{tpu_custom_call.1} parent=1 // pred_check
      _
    $region39: #{tpu_custom_call.1} parent=1 // pred_check_branch
      %61 = sbr.rel (0) target = $region41
    $region40: #{tpu_custom_call.1} parent=1 // pred_region
      %62 = dma.done [#allocation4], 16
    $region41: #{tpu_custom_call.1} parent=1 // pred_fallthru
      _
    // Predicated region
    $region42: #{tpu_custom_call.1} parent=1 // pred_check
      _
    $region43: #{tpu_custom_call.1} parent=1 // pred_check_branch
      %64 = sbr.rel (0) target = $region45
    $region44: #{tpu_custom_call.1} parent=1 // pred_region
      %65 = dma.done [#allocation7], 64
    $region45: #{tpu_custom_call.1} parent=1 // pred_fallthru
      _
    // Predicated region
    $region46: #{tpu_custom_call.1} parent=1 // pred_check
      _
    $region47: #{tpu_custom_call.1} parent=1 // pred_check_branch
      %67 = sbr.rel (0) target = $region49
    $region48: #{tpu_custom_call.1} parent=1 // pred_region
      %68 = dma.done [#allocation7], 16
    $region49: #{tpu_custom_call.1} parent=1 // pred_fallthru
      _
    %v70 = vld [vmem:[%s0] sm:$0xf]
    %v71 = vld [vmem:[%s0 + $0x4] sm:$0xf]
    %v72 = vunpack.c.l.bf16 %v70
    %v73 = vunpack.c.l.bf16 %v71
    %v74 = vld [vmem:[%s1] sm:$0xf]
    %v75 = vld [vmem:[%s1 + $0x4] sm:$0xf]
    %v76 = vld [vmem:[%s1 + $0x8] sm:$0xf]
    %v77 = vld [vmem:[%s1 + $0xc] sm:$0xf]
    %v78 = vld [vmem:[#allocation3] sm:$0x1]
    %v80 = vlaneseq
    %v81 = vshrl.u32 %v80, 7
    %v82 = vsub.s32 0, %v81
    %v83 = vrot.slane %v78, %v82
    %v87 = vunpack.c.l.b16 %v70
    %v88 = vunpack.c.l.b16 %v71
    %v89 = vpack.c.b16 %v88, %v87
    %v94 = vunpack.c.l.b16 %v74
    %v95 = vunpack.c.l.b16 %v75
    %v96 = vunpack.c.l.b16 %v76
    %v97 = vunpack.c.l.b16 %v77
    %v98 = vpack.c.b16 %v95, %v94
    %v99 = vpack.c.b16 %v97, %v96
    %vm102 = vcmask 261120
    %v104 = vsel %vm102, %v89, 0
    %106 = vmatprep.subr.bf16.mxu0 0
    %107 = vmatpush1.bf16.msra.mxu0 %v98
    %108 = vmatprep.subr.bf16.mxu0 0
    %109 = vmatpush1.bf16.msra.mxu0 %v99
    %110 = vmatprep.subr.bf16.mxu0 0
    %111 = vmatpush1.bf16.msra.mxu0 0
    %112 = vmatprep.subr.bf16.mxu0 0
    %113 = vmatpush1.bf16.msra.mxu0 0
    %114 = vmatprep.subr.bf16.mxu0 0
    %115 = vmatpush1.bf16.msra.mxu0 0
    %116 = vmatprep.subr.bf16.mxu0 0
    %117 = vmatpush1.bf16.msra.mxu0 0
    %118 = vmatprep.subr.bf16.mxu0 0
    %119 = vmatpush1.bf16.msra.mxu0 0
    %120 = vmatprep.subr.bf16.mxu0 0
    %121 = vmatpush1.bf16.msra.mxu0 0
    %122 = vmatprep.subr.bf16.mxu0 0
    %123 = vmatpush1.bf16.msra.mxu0 0
    %124 = vmatprep.subr.bf16.mxu0 0
    %125 = vmatpush1.bf16.msra.mxu0 0
    %126 = vmatprep.subr.bf16.mxu0 0
    %127 = vmatpush1.bf16.msra.mxu0 0
    %128 = vmatprep.subr.bf16.mxu0 0
    %129 = vmatpush1.bf16.msra.mxu0 0
    %130 = vmatprep.subr.bf16.mxu0 0
    %131 = vmatpush1.bf16.msra.mxu0 0
    %132 = vmatprep.subr.bf16.mxu0 0
    %133 = vmatpush1.bf16.msra.mxu0 0
    %134 = vmatprep.subr.bf16.mxu0 0
    %135 = vmatpush1.bf16.msra.mxu0 0
    %136 = vmatprep.subr.bf16.mxu0 0
    %137 = vmatpush1.bf16.msra.mxu0 0
    %138 = vmatprep.mubr.bf16.mxu0 0
    %139 = vmatmul.mubr.bf16.gmra.mrb[0].mxu0 %v104
    %v140 = vpop.f32.mrb[0].mxu0
    %v141 = vadd.f32 %v83, %v140
    %v142 = vpop.f32.mrb[0].mxu0
    %v143 = vpop.f32.mrb[0].mxu0
    %v144 = vadd.f32 %v83, %v143
    %v145 = vpop.f32.mrb[0].mxu0
    %146 = vdwg.mxu0
    %v147 = vmul.f32 %v141, 0.5
    %v148 = vmul.f32 %v144, 0.5
    %v149 = vmul.f32 %v141, 0.70710677
    %v150 = vmul.f32 %v144, 0.70710677
    %v151 = verf.f32.pop %v149
    %v152 = verf.f32.pop %v150
    %v153 = vadd.f32 %v151, 1.0
    %v154 = vadd.f32 %v152, 1.0
    %v155 = vmul.f32 %v147, %v153
    %v156 = vmul.f32 %v148, %v154
    %v157 = vpack.c.bf16 %v156, %v155
    %v158 = vld [vmem:[#allocation6] sm:$0xf]
    %v159 = vld [vmem:[#allocation8] sm:$0x1]
    %v161 = vlaneseq
    %v162 = vshrl.u32 %v161, 7
    %v163 = vsub.s32 0, %v162
    %v164 = vrot.slane %v159, %v163
    %vm166 = vcmask 64512
    %v168 = vsel %vm166, %v157, 0
    %vm170 = vcmask 1043456
    %v172 = vsel %vm170, %v158, 0
    %174 = vmatprep.subr.bf16.mxu0 0
    %175 = vmatpush1.bf16.msra.mxu0 %v172
    %176 = vmatprep.subr.bf16.mxu0 0
    %177 = vmatpush1.bf16.msra.mxu0 0
    %178 = vmatprep.subr.bf16.mxu0 0
    %179 = vmatpush1.bf16.msra.mxu0 0
    %180 = vmatprep.subr.bf16.mxu0 0
    %181 = vmatpush1.bf16.msra.mxu0 0
    %182 = vmatprep.subr.bf16.mxu0 0
    %183 = vmatpush1.bf16.msra.mxu0 0
    %184 = vmatprep.subr.bf16.mxu0 0
    %185 = vmatpush1.bf16.msra.mxu0 0
    %186 = vmatprep.subr.bf16.mxu0 0
    %187 = vmatpush1.bf16.msra.mxu0 0
    %188 = vmatprep.subr.bf16.mxu0 0
    %189 = vmatpush1.bf16.msra.mxu0 0
    %190 = vmatprep.subr.bf16.mxu0 0
    %191 = vmatpush1.bf16.msra.mxu0 0
    %192 = vmatprep.subr.bf16.mxu0 0
    %193 = vmatpush1.bf16.msra.mxu0 0
    %194 = vmatprep.subr.bf16.mxu0 0
    %195 = vmatpush1.bf16.msra.mxu0 0
    %196 = vmatprep.subr.bf16.mxu0 0
    %197 = vmatpush1.bf16.msra.mxu0 0
    %198 = vmatprep.subr.bf16.mxu0 0
    %199 = vmatpush1.bf16.msra.mxu0 0
    %200 = vmatprep.subr.bf16.mxu0 0
    %201 = vmatpush1.bf16.msra.mxu0 0
    %202 = vmatprep.subr.bf16.mxu0 0
    %203 = vmatpush1.bf16.msra.mxu0 0
    %204 = vmatprep.subr.bf16.mxu0 0
    %205 = vmatpush1.bf16.msra.mxu0 0
    %206 = vmatprep.mubr.bf16.mxu0 0
    %207 = vmatmul.mubr.bf16.gmra.mrb[0].mxu0 %v168
    %v208 = vpop.f32.mrb[0].mxu0
    %v209 = vadd.f32 %v164, %v208
    %v210 = vpop.f32.mrb[0].mxu0
    %v211 = vpop.f32.mrb[0].mxu0
    %v212 = vadd.f32 %v164, %v211
    %v213 = vpop.f32.mrb[0].mxu0
    %214 = vdwg.mxu0
    %v215 = vadd.f32 %v72, %v209
    %v216 = vadd.f32 %v73, %v212
    %v217 = vpack.c.bf16 %v216, %v215
    %v218 = vld [vmem:[%s5] sm:$0xff]
    %v219 = vld [vmem:[%s5 + $0x8] sm:$0xff]
    %v220 = vld [vmem:[%s5 + $0x10] sm:$0xff]
    %v221 = vld [vmem:[%s5 + $0x18] sm:$0xff]
    %v222 = vld [vmem:[%s6] sm:$0x3]
    %v224 = vlaneseq
    %v225 = vshrl.u32 %v224, 7
    %v226 = vsub.s32 0, %v225
    %v227 = vrot.slane %v222, %v226
    %v228 = vlaneseq
    %v229 = vshrl.u32 %v228, 7
    %v230 = vsub.s32 1, %v229
    %v231 = vrot.slane %v222, %v230
    %v238 = vunpack.c.l.b16 %v218
    %v239 = vunpack.c.h.b16 %v218
    %v240 = vunpack.c.l.b16 %v219
    %v241 = vunpack.c.h.b16 %v219
    %v242 = vunpack.c.l.b16 %v220
    %v243 = vunpack.c.h.b16 %v220
    %v244 = vunpack.c.l.b16 %v221
    %v245 = vunpack.c.h.b16 %v221
    %v246 = vpack.c.b16 %v240, %v238
    %v247 = vpack.c.b16 %v241, %v239
    %v248 = vpack.c.b16 %v244, %v242
    %v249 = vpack.c.b16 %v245, %v243
    %v255 = vsel %vm102, %v217, 0
    %257 = vmatprep.subr.bf16.mxu0 %v247
    %258 = vmatpush1.bf16.msra.mxu0 %v246
    %259 = vmatprep.subr.bf16.mxu0 %v249
    %260 = vmatpush1.bf16.msra.mxu0 %v248
    %261 = vmatprep.subr.bf16.mxu0 0
    %262 = vmatpush1.bf16.msra.mxu0 0
    %263 = vmatprep.subr.bf16.mxu0 0
    %264 = vmatpush1.bf16.msra.mxu0 0
    %265 = vmatprep.subr.bf16.mxu0 0
    %266 = vmatpush1.bf16.msra.mxu0 0
    %267 = vmatprep.subr.bf16.mxu0 0
    %268 = vmatpush1.bf16.msra.mxu0 0
    %269 = vmatprep.subr.bf16.mxu0 0
    %270 = vmatpush1.bf16.msra.mxu0 0
    %271 = vmatprep.subr.bf16.mxu0 0
    %272 = vmatpush1.bf16.msra.mxu0 0
    %273 = vmatprep.subr.bf16.mxu0 0
    %274 = vmatpush1.bf16.msra.mxu0 0
    %275 = vmatprep.subr.bf16.mxu0 0
    %276 = vmatpush1.bf16.msra.mxu0 0
    %277 = vmatprep.subr.bf16.mxu0 0
    %278 = vmatpush1.bf16.msra.mxu0 0
    %279 = vmatprep.subr.bf16.mxu0 0
    %280 = vmatpush1.bf16.msra.mxu0 0
    %281 = vmatprep.subr.bf16.mxu0 0
    %282 = vmatpush1.bf16.msra.mxu0 0
    %283 = vmatprep.subr.bf16.mxu0 0
    %284 = vmatpush1.bf16.msra.mxu0 0
    %285 = vmatprep.subr.bf16.mxu0 0
    %286 = vmatpush1.bf16.msra.mxu0 0
    %287 = vmatprep.subr.bf16.mxu0 0
    %288 = vmatpush1.bf16.msra.mxu0 0
    %289 = vmatprep.mubr.bf16.mxu0 0
    %290 = vmatmul.mubr.bf16.gmra.mrb[0].mxu0 %v255
    %v291 = vpop.f32.mrb[0].mxu0
    %v292 = vadd.f32 %v227, %v291
    %v293 = vpop.f32.mrb[0].mxu0
    %v294 = vadd.f32 %v231, %v293
    %v295 = vpop.f32.mrb[0].mxu0
    %v296 = vadd.f32 %v227, %v295
    %v297 = vpop.f32.mrb[0].mxu0
    %v298 = vadd.f32 %v231, %v297
    %299 = vdwg.mxu0
    %v300 = vmax.f32 %v292, 0.0
    %v301 = vmax.f32 %v294, 0.0
    %v302 = vmax.f32 %v296, 0.0
    %v303 = vmax.f32 %v298, 0.0
    %v304 = vld [vmem:[%s7] sm:$0x3]
    %v306 = vlaneseq
    %v307 = vshrl.u32 %v306, 7
    %v308 = vsub.s32 0, %v307
    %v309 = vrot.slane %v304, %v308
    %v310 = vlaneseq
    %v311 = vshrl.u32 %v310, 7
    %v312 = vsub.s32 1, %v311
    %v313 = vrot.slane %v304, %v312
    %v316 = vmul.f32 %v300, %v309
    %v317 = vmul.f32 %v301, %v313
    %v318 = vmul.f32 %v302, %v309
    %v319 = vmul.f32 %v303, %v313
    %v320 = vadd.f32 %v316, %v317
    %321 = vadd.xlane.f32.xlu0 %v320
    %v322 = vpop.xlane.xlu0 %321
    %v323 = vadd.f32 %v318, %v319
    %324 = vadd.xlane.f32.xlu0 %v323
    %v325 = vpop.xlane.xlu0 %324
    %s326 = sld [smem:[#allocation2]]
    %v327 = vstv %s326
    %v328 = vadd.f32 %v322, %v327
    %v329 = vadd.f32 %v325, %v327
    %v332 = vlaneseq
    %v333 = vand.u32 %v332, 127
    %v334 = vlaneseq
    %v335 = vshrl.u32 %v334, 7
    %v336 = vsub.s32 %v333, %v335
    %v337 = vrot.slane %v328, %v336
    %v338 = vadd.s32 %v333, 4294967288
    %v339 = vlaneseq
    %v340 = vshrl.u32 %v339, 7
    %v341 = vsub.s32 %v338, %v340
    %v342 = vrot.slane %v329, %v341
    %vm343 = vcmask 130112
    %v344 = vsel %vm343, %v342, %v337
    %vm346 = vcmask 122880
    %347 = vst.msk [vmem:[#allocation9] sm:$0x1] %vm346, %v344
    // Predicated region
    $region50: #{tpu_custom_call.1} parent=1 // pred_check
      _
    $region51: #{tpu_custom_call.1} parent=1 // pred_check_branch
      %349 = sbr.rel (0) target = $region53
    $region52: #{tpu_custom_call.1} parent=1 // pred_region
      %s351 = ssub.s32 16, 16
      %352 = vsyncadd [#allocation5], %s351
      %s354 = sshll.u32 [#allocation9], 4
      %s355 = int_to_ptr.vmem [resolvable:$true] %s354
      %357 = dma.vmem_to_hbm [thread:$0]  %s355, 16, %s9, [#allocation5]
    $region53: #{tpu_custom_call.1} parent=1 // pred_fallthru
      _
    // Predicated region
    $region54: #{tpu_custom_call.1} parent=1 // pred_check
      _
    $region55: #{tpu_custom_call.1} parent=1 // pred_check_branch
      %359 = sbr.rel (0) target = $region57
    $region56: #{tpu_custom_call.1} parent=1 // pred_region
      %360 = dma.done [#allocation5], 16
    $region57: #{tpu_custom_call.1} parent=1 // pred_fallthru
      _
    %361 = vsyncpa [#allocation4], 1
    %362 = vsyncpa [#allocation7], 1
    %363 = vsyncpa [#allocation5], 1

</llo_original>
